<compile_context>
chip_gen: v6e
topology: v6e:2x2x1
jax: 0.10.0
libtpu: 0.0.40
codegen_flags: <defaults>
</compile_context>

<pallas_src>
import math

import jax
import jax.numpy as jnp
from jax.experimental import pallas as pl
from jax.experimental.pallas import tpu as pltpu


def _round_up(x: int, m: int) -> int:
    return ((x + m - 1) // m) * m


def _embed_pe_kernel(ids_ref,      # SMEM  (batch*seq,) int32   (scalar prefetch)
                     table_hbm,    # HBM   (vocab, d_pad) f32   (memory_space=ANY)
                     pe_ref,       # VMEM  (TB, d_pad)    f32   (per-tile PE, pipelined)
                     out_ref,      # VMEM  (1, TB, d_pad) f32   (output tile)
                     rows_vmem,    # VMEM  (TB, d_pad)    f32   scratch: gathered rows
                     sem):         # DMA semaphore
    b = pl.program_id(0)
    s = pl.program_id(1)
    seq_blocks = pl.num_programs(1)
    tb = rows_vmem.shape[0]
    base = (b * seq_blocks + s) * tb          # flat token offset of this tile

    # Issue all row-gather DMAs for this tile (table rows stream HBM -> VMEM).
    @pl.loop(0, tb)
    def _issue(j):
        row = ids_ref[base + j]
        pltpu.make_async_copy(table_hbm.at[pl.ds(row, 1), :],
                              rows_vmem.at[pl.ds(j, 1), :],
                              sem).start()

    # Drain: one wait per issued copy.  All copies have identical size and
    # share the semaphore, so aggregate waiting is safe; after the loop every
    # gathered row is resident.
    @pl.loop(0, tb)
    def _drain(j):
        pltpu.make_async_copy(table_hbm.at[pl.ds(0, 1), :],
                              rows_vmem.at[pl.ds(j, 1), :],
                              sem).wait()

    # Fused additive positional encoding; lane-dense (d_pad % 128 == 0) store.
    out_ref[0, :, :] = (rows_vmem[...] + pe_ref[...]).astype(out_ref.dtype)


def make_positional_encoding(d_model: int, max_len: int = 5000,
                             dtype=jnp.float32) -> jnp.ndarray:
    """Exact reproduction of PositionalEncoding.__init__ buffer `pe`."""
    position = jnp.arange(max_len, dtype=dtype)[:, None]              # (max_len, 1)
    div_term = jnp.exp(
        2.0 * jnp.arange(0, d_model, 2, dtype=dtype)
        * (-math.log(10000.0) / d_model)
    )                                                                 # (d_model//2,)
    pe = jnp.zeros((max_len, d_model), dtype=dtype)
    pe = pe.at[:, 0::2].set(jnp.sin(position * div_term))
    pe = pe.at[:, 1::2].set(jnp.cos(position * div_term))
    return pe                                                         # (max_len, d_model)


def embedding_forward(ids: jnp.ndarray, table: jnp.ndarray,
                      pe: jnp.ndarray) -> jnp.ndarray:
    """ids: (batch, seq) int32; table: (vocab, d_model); pe: (max_len, d_model)."""
    batch, seq = ids.shape
    vocab, d_model = table.shape

    # Lane-dense feature dim: pad to a multiple of 128 (no-op when d_model
    # is already a multiple of 128, the usual case for real models).
    d_pad = _round_up(d_model, 128)
    if d_pad != d_model:
        table_p = jnp.pad(table, ((0, 0), (0, d_pad - d_model)))
        pe_slice = jnp.pad(pe[:seq, :], ((0, 0), (0, d_pad - d_model)))
    else:
        table_p = table
        pe_slice = pe[:seq, :]

    # Token-tile size along seq (multiple of 8, or the full seq dim).
    if seq % 256 == 0:
        tb = 256
    elif seq % 128 == 0:
        tb = 128
    else:
        tb = seq
    seq_blocks = seq // tb

    # Clip ids so an out-of-range token can never trigger an OOB HBM DMA
    # (matches jnp.take clamping; valid inputs are unaffected).
    flat_ids = jnp.clip(ids, 0, vocab - 1).astype(jnp.int32).reshape(-1)

    out_padded = pl.pallas_call(
        _embed_pe_kernel,
        out_shape=jax.ShapeDtypeStruct((batch, seq, d_pad), table.dtype),
        grid_spec=pltpu.PrefetchScalarGridSpec(
            num_scalar_prefetch=1,                         # flat_ids -> SMEM
            grid=(batch, seq_blocks),
            in_specs=[
                pl.BlockSpec(memory_space=pl.ANY),         # table stays in HBM
                pl.BlockSpec((tb, d_pad), lambda b, s, ids: (s, 0)),   # PE tile
            ],
            out_specs=pl.BlockSpec((1, tb, d_pad), lambda b, s, ids: (b, s, 0)),
            scratch_shapes=[
                pltpu.VMEM((tb, d_pad), table.dtype),      # gathered rows
                pltpu.SemaphoreType.DMA(()),
            ],
        ),
        compiler_params=pltpu.CompilerParams(
            dimension_semantics=("parallel", "parallel")),
    )(flat_ids, table_p, pe_slice)

    return out_padded[..., :d_model]


if __name__ == "__main__":
    # Small, deterministic configuration consistent with the module.
    d_model = 32
    vocab_len = 64
    pad_index = 0
    batch, seq = 2, 8

    key = jax.random.PRNGKey(0)
    k_w, k_ids = jax.random.split(key)

    # nn.Embedding default init: N(0, 1); padding_idx row is zeroed.
    table = jax.random.normal(k_w, (vocab_len, d_model), dtype=jnp.float32)
    table = table.at[pad_index, :].set(0.0)

    pe = make_positional_encoding(d_model, max_len=5000)

    ids = jax.random.randint(k_ids, (batch, seq), 0, vocab_len, dtype=jnp.int32)
    # Make sure the padding index appears at least once (exercises zero row).
    ids = ids.at[0, 0].set(pad_index)

    out = embedding_forward(ids, table, pe)
    out = jax.block_until_ready(out)

    # Plain-JAX reference for the same semantics.
    ref = jnp.take(table, ids, axis=0) + pe[None, :seq, :]
    assert out.shape == (batch, seq, d_model)
    assert jnp.allclose(out, ref, atol=1e-5, rtol=1e-5)

    print("KERNEL_OK")
</pallas_src>

<mosaic_0001>
module attributes {stable_mosaic.version = 11 : i64} {
  func.func @_embed_pe_kernel(%arg0: i32, %arg1: i32, %arg2: memref<16xi32, #tpu.memory_space<smem>>, %arg3: memref<64x128xf32, #tpu.memory_space<any>>, %arg4: memref<8x128xf32, #tpu.memory_space<vmem>>, %arg5: memref<1x8x128xf32, #tpu.memory_space<vmem>>, %arg6: memref<8x128xf32, #tpu.memory_space<vmem>>, %arg7: memref<!tpu.dma_semaphore, #tpu.memory_space<semaphore_mem>>) attributes {dimension_semantics = [#tpu.dimension_semantics<parallel>, #tpu.dimension_semantics<parallel>], iteration_bounds = array<i64: 2, 1>, scalar_prefetch = 1 : i64, scratch_operands = 2 : i64, tpu.core_type = #tpu.core_type<tc>, window_params = [{}, {transform_indices = @transform_1, window_bounds = array<i64: 8, 128>}, {transform_indices = @transform_2, window_bounds = array<i64: 1, 8, 128>}]} {
    %c1_i32 = arith.constant 1 : i32
    %0 = arith.muli %arg0, %c1_i32 : i32
    %1 = arith.addi %0, %arg1 : i32
    %c8_i32 = arith.constant 8 : i32
    %2 = arith.muli %1, %c8_i32 : i32
    %c0_i32 = arith.constant 0 : i32
    %c8_i32_0 = arith.constant 8 : i32
    %3 = arith.addi %c0_i32, %c8_i32_0 : i32
    %c1_i32_1 = arith.constant 1 : i32
    scf.for %arg8 = %c0_i32 to %3 step %c1_i32_1  : i32 {
      %c1_i32_13 = arith.constant 1 : i32
      %11 = arith.muli %arg8, %c1_i32_13 : i32
      %c0_i32_14 = arith.constant 0 : i32
      %12 = arith.addi %c0_i32_14, %11 : i32
      %13 = arith.addi %2, %12 : i32
      %14 = arith.index_cast %13 : i32 to index
      %15 = memref.load %arg2[%14] : memref<16xi32, #tpu.memory_space<smem>>
      %c0_i32_15 = arith.constant 0 : i32
      %16 = tpu.memref_slice %arg3[%15, %c0_i32_15] : memref<64x128xf32, #tpu.memory_space<any>> -> memref<1x128xf32, #tpu.memory_space<any>>
      %c0_i32_16 = arith.constant 0 : i32
      %17 = tpu.memref_slice %arg6[%12, %c0_i32_16] : memref<8x128xf32, #tpu.memory_space<vmem>> -> memref<1x128xf32, #tpu.memory_space<vmem>>
      tpu.enqueue_dma source(%16 : memref<1x128xf32, #tpu.memory_space<any>>) target(%17 : memref<1x128xf32, #tpu.memory_space<vmem>>) target_semaphore(%arg7 : memref<!tpu.dma_semaphore, #tpu.memory_space<semaphore_mem>>)
    }
    %c8_i32_2 = arith.constant 8 : i32
    %c0_i32_3 = arith.constant 0 : i32
    %c8_i32_4 = arith.constant 8 : i32
    %4 = arith.addi %c0_i32_3, %c8_i32_4 : i32
    %c1_i32_5 = arith.constant 1 : i32
    scf.for %arg8 = %c0_i32_3 to %4 step %c1_i32_5  : i32 {
      %c1_i32_13 = arith.constant 1 : i32
      %11 = arith.muli %arg8, %c1_i32_13 : i32
      %c0_i32_14 = arith.constant 0 : i32
      %12 = arith.addi %c0_i32_14, %11 : i32
      %c0_i32_15 = arith.constant 0 : i32
      %c0_i32_16 = arith.constant 0 : i32
      %13 = tpu.memref_slice %arg3[%c0_i32_15, %c0_i32_16] : memref<64x128xf32, #tpu.memory_space<any>> -> memref<1x128xf32, #tpu.memory_space<any>>
      %c0_i32_17 = arith.constant 0 : i32
      %14 = tpu.memref_slice %arg6[%12, %c0_i32_17] : memref<8x128xf32, #tpu.memory_space<vmem>> -> memref<1x128xf32, #tpu.memory_space<vmem>>
      tpu.wait_dma2 semaphore(%arg7 : memref<!tpu.dma_semaphore, #tpu.memory_space<semaphore_mem>>) src(%13 : memref<1x128xf32, #tpu.memory_space<any>>) dst(%14 : memref<1x128xf32, #tpu.memory_space<vmem>>)
    }
    %c8_i32_6 = arith.constant 8 : i32
    %c0 = arith.constant 0 : index
    %c0_7 = arith.constant 0 : index
    %5 = vector.load %arg6[%c0, %c0_7] : memref<8x128xf32, #tpu.memory_space<vmem>>, vector<8x128xf32>
    %c0_8 = arith.constant 0 : index
    %c0_9 = arith.constant 0 : index
    %6 = vector.load %arg4[%c0_8, %c0_9] : memref<8x128xf32, #tpu.memory_space<vmem>>, vector<8x128xf32>
    %7 = arith.addf %5, %6 : vector<8x128xf32>
    %c0_10 = arith.constant 0 : index
    %c0_11 = arith.constant 0 : index
    %c0_12 = arith.constant 0 : index
    %8 = vector.load %arg5[%c0_10, %c0_11, %c0_12] : memref<1x8x128xf32, #tpu.memory_space<vmem>>, vector<1x8x128xf32>
    %9 = vector.shape_cast %8 : vector<1x8x128xf32> to vector<8x128xf32>
    %10 = vector.shape_cast %7 : vector<8x128xf32> to vector<1x8x128xf32>
    tpu.vector_store %arg5[%c0_10, %c0_11, %c0_12], %10 {strides = array<i32>} : memref<1x8x128xf32, #tpu.memory_space<vmem>>, vector<1x8x128xf32>,
    return
  }
  func.func @transform_1(%arg0: i32, %arg1: i32, %arg2: memref<16xi32, #tpu.memory_space<smem>>) -> (i32, i32) {
    %c0_i32 = arith.constant 0 : i32
    %c0_i32_0 = arith.constant 0 : i32
    return %arg1, %c0_i32 : i32, i32
  }
  func.func @transform_2(%arg0: i32, %arg1: i32, %arg2: memref<16xi32, #tpu.memory_space<smem>>) -> (i32, i32, i32) {
    %c0_i32 = arith.constant 0 : i32
    %c0_i32_0 = arith.constant 0 : i32
    return %arg0, %arg1, %c0_i32 : i32, i32, i32
  }
}

</mosaic_0001>

<llo_original>
// kernel: tpu_custom_call.1
$region0: #{tpu_custom_call.1}
  #allocation0 [shape = 'u32[]', space=smem, size = 0x4, offset = 0x4, fixed_abs, tag = 'smem constant byte address 0x4 - core index']
  #allocation1 [shape = 'u32[144,128]{1,0:T(1,128)}', space=vmem, size = 0x12000, scoped, tag = 'internal scratch']
  #allocation2 [shape = 'f32[8,128]{1,0:T(8,128)}', space=vmem, size = 0x1000, scoped, tag = 'scratch operand']
  #allocation3 [shape = 's32[1]{0}', space=sflag, size = 0x4, scoped, tag = 'scratch operand']
  #allocation4 [shape = 's32[1]{0}', space=sflag, size = 0x4, scoped, tag = 'scoped memory for tpu_custom_call.1']
  #allocation5 [shape = 'u8[512]{0}', space=smem, size = 0x200, scoped, tag = 'prefetched SMEM operand 0']
  #allocation10 [shape = 's32[]', space=sflag, size = 0x4, offset = 0, fixed_abs, tag = 'sflag constant byte address 0x0 - dummy sync flag']
  #allocation11 [shape = 's32[]', space=sflag, size = 0x4, offset = 0, fixed_abs, tag = 'sflag constant byte address 0x0 - dummy sync flag']
  #allocation12 [shape = 'u32[]', space=smem, size = 0x4, offset = 0x44, fixed_abs, tag = 'smem constant byte address 0x44 - assertion arg 0']
  #allocation13 [shape = 'u32[]', space=smem, size = 0x4, offset = 0x48, fixed_abs, tag = 'smem constant byte address 0x48 - assertion arg 1']
  %s0 = inlined_call_operand.hbm [shape: s32[16], index: 0, kind: input, shape index: {}]
  %s1 = inlined_call_operand.hbm [shape: f32[64,128], index: 1, kind: input, shape index: {}]
  %s2 = inlined_call_operand.hbm [shape: f32[8,128], index: 2, kind: input, shape index: {}]
  %s3 = inlined_call_operand.hbm [shape: f32[2,8,128], index: 3, kind: output, shape index: {}]
  %s4 = sld [smem:[#allocation0]]
  $region59: #{tpu_custom_call.1} parent=0
    _
  %s6 = ssub.s32 1, %s4
  %s7 = scalar_select 0, %s6, %s4
  %9 = dma.hbm_to_smem %s0, 16, [#allocation5], [#allocation4]
  %10 = dma.done [#allocation4], 16
  %11 = sfence
  $region1: #{tpu_custom_call.1} parent=0
    #allocation6 [shape = 'u8[4096]{0}', space=vmem, size = 0x1000, scoped, tag = 'input window, operand 2, single buffered']
    #allocation7 [shape = 's32[2]{0}', space=sflag, size = 0x8, scoped, tag = 'scoped memory for tpu_custom_call.1']
    #allocation8 [shape = 's32[2]{0}', space=sflag, size = 0x8, scoped, tag = 'scoped memory for tpu_custom_call.1']
    #allocation9 [shape = 'u8[8192]{0}', space=vmem, size = 0x2000, scoped, tag = 'output window, operand 0']
    %12 = vsyncpa [#allocation7], 0
    %13 = vsyncpa [#allocation8], 0
    %s14 = scalar_lea.sflag [#allocation8], 1
    %15 = vsyncpa %s14, 0
    loop: start=0, step=1, limit=4
    $region2: #{tpu_custom_call.1} parent=1 // loop_pre_header
      _
    $region3: #{tpu_custom_call.1} parent=1 // loop_header
      %s17 = sphi 0, %s21
      %p18 = scmp.ge.s32.totalorder %s17, 4
      %s24 = sphi 0, %s36
      %s25 = sphi 0, %s32
      %s26 = sphi 0, %s24
      %s27 = sphi 0, %s25
      %s28 = sphi 0, %s26
      %s29 = sphi 0, %s27
      %s39 = sphi 0, %s41
      %s42 = sphi 0, %s39
      %s43 = sphi 0, %s42
      %s59 = sphi 0, %s43
      %s67 = sphi 0, %s69
      %s70 = sphi 0, %s67
      %s71 = sphi 0, %s70
      %s87 = sphi 0, %s71
    $region4: #{tpu_custom_call.1} parent=1 // loop_header_branch
      %20 = sbr.rel (%p18) target = $region8
    $region5: #{tpu_custom_call.1} parent=1 // loop_body
      %s22 = ssub.s32 %s17, 1
      %s23 = ssub.s32 %s17, 2
      %s30 = sadd.s32 1, %s25
      %p31 = scmp.ge.s32.totalorder %s30, 1
      %s32 = scalar_select %p31, 0, %s30
      %s33 = sadd.s32 1, %s24
      %s34 = scalar_select %p31, %s33, %s24
      %p35 = scmp.ge.s32.totalorder %s34, 2
      %s36 = scalar_select %p35, 0, %s34
      %s37 = ssub.s32 %s25, %s32
      %p38 = scmp.eq.s32.totalorder %s37, 0
      %s40 = sadd.s32 %s39, 1
      %s41 = scalar_select %p38, %s39, %s40
      %p44 = pneg %p38
      %p45 = scmp.eq.s32.totalorder %s17, 1
      %p46 = por %p44, %p45
      %p47 = scmp.ne.s32.totalorder %s39, %s42
      %p48 = scmp.eq.s32.totalorder %s17, 0
      %p49 = por %p47, %p48
      %p50 = scmp.ne.s32.totalorder %s39, %s42
      %p51 = scmp.eq.s32.totalorder %s22, 1
      %p52 = por %p50, %p51
      %p53 = scmp.ne.s32.totalorder %s42, %s43
      %p54 = scmp.eq.s32.totalorder %s22, 0
      %p55 = por %p53, %p54
      %p56 = scmp.ne.s32.totalorder %s42, %s43
      %p57 = scmp.eq.s32.totalorder %s23, 1
      %p58 = por %p56, %p57
      %p60 = scmp.ne.s32.totalorder %s43, %s59
      %p61 = scmp.eq.s32.totalorder %s23, 0
      %p62 = por %p60, %p61
      %s63 = ssub.s32 %s24, %s36
      %s64 = ssub.s32 %s25, %s32
      %s65 = sor.u32 %s63, %s64
      %p66 = scmp.eq.s32.totalorder %s65, 0
      %s68 = sadd.s32 %s67, 1
      %s69 = scalar_select %p66, %s67, %s68
      %p72 = pneg %p66
      %p73 = scmp.eq.s32.totalorder %s17, 1
      %p74 = por %p72, %p73
      %p75 = scmp.ne.s32.totalorder %s67, %s70
      %p76 = scmp.eq.s32.totalorder %s17, 0
      %p77 = por %p75, %p76
      %p78 = scmp.ne.s32.totalorder %s67, %s70
      %p79 = scmp.eq.s32.totalorder %s22, 1
      %p80 = por %p78, %p79
      %p81 = scmp.ne.s32.totalorder %s70, %s71
      %p82 = scmp.eq.s32.totalorder %s22, 0
      %p83 = por %p81, %p82
      %p84 = scmp.ne.s32.totalorder %s70, %s71
      %p85 = scmp.eq.s32.totalorder %s23, 1
      %p86 = por %p84, %p85
      %p88 = scmp.ne.s32.totalorder %s71, %s87
      %p89 = scmp.eq.s32.totalorder %s23, 0
      %p90 = por %p88, %p89
      %p91 = scmp.le.s32.totalorder 1, %s17
      %p92 = scmp.lt.s32.totalorder %s17, 3
      %p93 = pnand %p91, %p92
      %p94 = pneg %p93
      // Predicated region
      $region9: #{tpu_custom_call.1} parent=5 // pred_check
        _
      $region10: #{tpu_custom_call.1} parent=5 // pred_check_branch
        %96 = sbr.rel (%p93) target = $region12
      $region11: #{tpu_custom_call.1} parent=5 // pred_region
        %s97 = ssub.s32 %s17, 1
        // Predicated region
        $region13: #{tpu_custom_call.1} parent=11 // pred_check
          %p98 = pneg %p55
        $region14: #{tpu_custom_call.1} parent=11 // pred_check_branch
          %100 = sbr.rel (%p98) target = $region16
        $region15: #{tpu_custom_call.1} parent=11 // pred_region
          %s102 = ssub.s32 128, 128
          %103 = vsyncadd [#allocation7], %s102
          %s104 = smul.addr %s27, 128
          %s105 = scalar_lea.hbm %s2, %s104
          %s107 = sshll.u32 [#allocation6], 4
          %s108 = int_to_ptr.vmem [resolvable:$true] %s107
          %110 = dma.hbm_to_vmem [thread:$0]  %s105, 128, %s108, [#allocation7]
        $region16: #{tpu_custom_call.1} parent=11 // pred_fallthru
          _
      $region12: #{tpu_custom_call.1} parent=5 // pred_fallthru
        _
      %p111 = scmp.lt.s32.totalorder %s17, 2
      // Predicated region
      $region17: #{tpu_custom_call.1} parent=5 // pred_check
        %p112 = pneg %p111
      $region18: #{tpu_custom_call.1} parent=5 // pred_check_branch
        %114 = sbr.rel (%p112) target = $region20
      $region19: #{tpu_custom_call.1} parent=5 // pred_region
        _
      $region20: #{tpu_custom_call.1} parent=5 // pred_fallthru
        _
      %p115 = scmp.le.s32.totalorder 1, %s17
      %p116 = scmp.lt.s32.totalorder %s17, 3
      %p117 = pnand %p115, %p116
      %p118 = pneg %p117
      // Predicated region
      $region21: #{tpu_custom_call.1} parent=5 // pred_check
        _
      $region22: #{tpu_custom_call.1} parent=5 // pred_check_branch
        %120 = sbr.rel (%p117) target = $region24
      $region23: #{tpu_custom_call.1} parent=5 // pred_region
        %s121 = ssub.s32 %s17, 1
        // Predicated region
        $region25: #{tpu_custom_call.1} parent=23 // pred_check
          %p122 = pneg %p55
        $region26: #{tpu_custom_call.1} parent=23 // pred_check_branch
          %124 = sbr.rel (%p122) target = $region28
        $region27: #{tpu_custom_call.1} parent=23 // pred_region
          %125 = dma.done [#allocation7], 128
        $region28: #{tpu_custom_call.1} parent=23 // pred_fallthru
          _
        %p126 = pneg %p55
        %p127 = pneg %p52
        %p128 = pneg %p83
        %p129 = pneg %p80
        %s130 = sand.u32 %s70, 1
        %s131 = scalar_lea.sflag [#allocation8], %s130
        %s132 = sand.u32 %s70, 1
        %s133 = smul.addr %s132, 8
        %s134 = scalar_lea.vmem [#allocation9], %s133
        %s135 = sadd.s32 %s26, %s27
        %s136 = smul.u32 %s135, 8
        loop: start=0, step=1, limit=8
        $region29: #{tpu_custom_call.1} parent=23 // loop_pre_header
          _
        $region30: #{tpu_custom_call.1} parent=23 // loop_header
          %s138 = sphi 0, %s142
          %p139 = scmp.ge.s32.totalorder %s138, 8
        $region31: #{tpu_custom_call.1} parent=23 // loop_header_branch
          %141 = sbr.rel (%p139) target = $region35
        $region32: #{tpu_custom_call.1} parent=23 // loop_body
          %s143 = sadd.s32 %s136, %s138
          %s144 = sld [smem:[#allocation5 + %s143]]
          %s145 = smul.addr %s144, 16
          %s146 = scalar_lea.hbm %s1, %s145
          %s147 = scalar_lea.vmem [#allocation2], %s138
          // Predicated region
          $region36: #{tpu_custom_call.1} parent=32 // pred_check
            _
          $region37: #{tpu_custom_call.1} parent=32 // pred_check_branch
            %149 = sbr.rel target = $region39
          $region38: #{tpu_custom_call.1} parent=32 // pred_region
            %150 = sst [smem:[#allocation12]] [#allocation11]
            %151 = sst [smem:[#allocation13]] [#allocation10]
          $region39: #{tpu_custom_call.1} parent=32 // pred_fallthru
            _
          %153 = shalt.err (0)
          %s155 = sshll.u32 %s147, 4
          %s156 = int_to_ptr.vmem [resolvable:$true] %s155
          %158 = dma.hbm_to_vmem [thread:$0]  %s146, 16, %s156, [#allocation3]
        $region33: #{tpu_custom_call.1} parent=23 // loop_footer
          %s142 = sadd.s32 1, %s138
        $region34: #{tpu_custom_call.1} parent=23 // loop_footer_branch
          %137 = sbr.rel target = $region30
        $region35: #{tpu_custom_call.1} parent=23 // loop_exit
          _
        loop: start=0, step=1, limit=8
        $region40: #{tpu_custom_call.1} parent=23 // loop_pre_header
          _
        $region41: #{tpu_custom_call.1} parent=23 // loop_header
          %s160 = sphi 0, %s164
          %p161 = scmp.ge.s32.totalorder %s160, 8
        $region42: #{tpu_custom_call.1} parent=23 // loop_header_branch
          %163 = sbr.rel (%p161) target = $region46
        $region43: #{tpu_custom_call.1} parent=23 // loop_body
          %s165 = smul.u32 1, 1
          %s166 = sshll.u32 %s165, 4
          %167 = dma.done [#allocation3], %s166
        $region44: #{tpu_custom_call.1} parent=23 // loop_footer
          %s164 = sadd.s32 1, %s160
        $region45: #{tpu_custom_call.1} parent=23 // loop_footer_branch
          %159 = sbr.rel target = $region41
        $region46: #{tpu_custom_call.1} parent=23 // loop_exit
          _
        %v168 = vld [vmem:[#allocation2] sm:$0xff]
        %v169 = vld [vmem:[#allocation6] sm:$0xff]
        %v170 = vadd.f32 %v168, %v169
        %171 = vst [vmem:[%s134] sm:$0xff] %v170
        %s172 = sand.u32 %s70, 1
        %s173 = scalar_lea.sflag [#allocation8], %s172
        %s174 = sand.u32 %s70, 1
        %s175 = smul.addr %s174, 8
        %s176 = scalar_lea.vmem [#allocation9], %s175
        // Predicated region
        $region47: #{tpu_custom_call.1} parent=23 // pred_check
          %p177 = pneg %p80
        $region48: #{tpu_custom_call.1} parent=23 // pred_check_branch
          %179 = sbr.rel (%p177) target = $region50
        $region49: #{tpu_custom_call.1} parent=23 // pred_region
          %s181 = ssub.s32 128, 128
          %182 = vsyncadd %s173, %s181
          %s183 = sadd.s32 %s27, %s26
          %s184 = smul.addr %s183, 128
          %s185 = scalar_lea.hbm %s3, %s184
          %s187 = sshll.u32 %s176, 4
          %s188 = int_to_ptr.vmem [resolvable:$true] %s187
          %190 = dma.vmem_to_hbm [thread:$0]  %s188, 128, %s185, %s173
        $region50: #{tpu_custom_call.1} parent=23 // pred_fallthru
          _
      $region24: #{tpu_custom_call.1} parent=5 // pred_fallthru
        _
      %p191 = scmp.le.s32.totalorder 2, %s17
      // Predicated region
      $region51: #{tpu_custom_call.1} parent=5 // pred_check
        %p192 = pneg %p191
      $region52: #{tpu_custom_call.1} parent=5 // pred_check_branch
        %194 = sbr.rel (%p192) target = $region54
      $region53: #{tpu_custom_call.1} parent=5 // pred_region
        %s195 = ssub.s32 %s17, 2
        // Predicated region
        $region55: #{tpu_custom_call.1} parent=53 // pred_check
          %p196 = pneg %p86
        $region56: #{tpu_custom_call.1} parent=53 // pred_check_branch
          %198 = sbr.rel (%p196) target = $region58
        $region57: #{tpu_custom_call.1} parent=53 // pred_region
          %s199 = sand.u32 %s71, 1
          %s200 = scalar_lea.sflag [#allocation8], %s199
          %s201 = sand.u32 %s71, 1
          %s202 = smul.addr %s201, 8
          %s203 = scalar_lea.vmem [#allocation9], %s202
          %204 = dma.done %s200, 128
        $region58: #{tpu_custom_call.1} parent=53 // pred_fallthru
          _
      $region54: #{tpu_custom_call.1} parent=5 // pred_fallthru
        _
    $region6: #{tpu_custom_call.1} parent=1 // loop_footer
      %s21 = sadd.s32 1, %s17
    $region7: #{tpu_custom_call.1} parent=1 // loop_footer_branch
      %16 = sbr.rel target = $region3
    $region8: #{tpu_custom_call.1} parent=1 // loop_exit
      _
    %205 = vsyncpa [#allocation7], 1
    %s206 = scalar_lea.sflag [#allocation7], 1
    %207 = vsyncpa %s206, 1
    %208 = vsyncpa [#allocation8], 1
    %s209 = scalar_lea.sflag [#allocation8], 1
    %210 = vsyncpa %s209, 1
  %211 = vsyncmov [#allocation3]
  %s212 = vpop.sfrf %211
  %p213 = scmp.eq.s32.totalorder %s212, 0
  %p214 = pneg %p213
  %216 = shalt.err (%p214)

</llo_original>
